<compile_context>
chip_gen: v7x
topology: tpu7x:2x2x1
jax: 0.10.0
libtpu: 0.0.40
codegen_flags: <defaults>
</compile_context>

<pallas_src>
import functools

import jax
import jax.numpy as jnp
from jax.experimental import pallas as pl
from jax.experimental.pallas import tpu as pltpu

EPS = 1e-5


def _round_up(x, m):
    return (x + m - 1) // m * m


# ---------------------------------------------------------------------------
# Kernel 1: streaming BN statistics.
#   Accumulates colsum(x) [1, Cin] and Gram G = x^T x [Cin, Cin] over M tiles
#   (accumulator outputs resident in VMEM across the whole grid).
# ---------------------------------------------------------------------------
def _stats_kernel(x_ref, colsum_ref, gram_ref):
    @pl.when(pl.program_id(0) == 0)
    def _init():
        colsum_ref[...] = jnp.zeros_like(colsum_ref)
        gram_ref[...] = jnp.zeros_like(gram_ref)

    x = x_ref[...]
    colsum_ref[...] += jnp.sum(x.astype(jnp.float32), axis=0, keepdims=True)
    # x^T x: contract the row (M) axis on the MXU, f32 accumulation.
    gram_ref[...] += jax.lax.dot_general(
        x, x, (((0,), (0,)), ((), ())), preferred_element_type=jnp.float32
    )


# ---------------------------------------------------------------------------
# Kernel 2: tap-packed GEMM with fused BatchNorm(scale/shift) + ReLU epilogue.
#   y = x_tile @ W_packed   ([TM, Cin] x [Cin, Npad])
#   o = relu(y * scale + shift)        -- output written exactly once.
# ---------------------------------------------------------------------------
def _gemm_bn_relu_kernel(x_ref, w_ref, scale_ref, shift_ref, o_ref):
    y = jnp.dot(x_ref[...], w_ref[...], preferred_element_type=jnp.float32)
    o_ref[...] = jnp.maximum(y * scale_ref[...] + shift_ref[...], 0.0).astype(o_ref.dtype)


def deconv2d_bn_forward(x, w_t, b, gamma, beta, *, tm=512, compute_dtype=jnp.bfloat16):
    """x: [N, Cin, H, W] NCHW. w_t: ConvTranspose2d weight [Cin, Cout, 2, 2].
    Returns [N, Cout, 2H, 2W] NCHW (f32)."""
    del b  # conv bias is exactly cancelled by train-mode BN mean subtraction.
    N, Cin, H, W = x.shape
    Cout = w_t.shape[1]
    M = N * H * W
    m_pad = _round_up(M, tm)
    mt = m_pad // tm
    n_packed = 4 * Cout
    n_pad = _round_up(n_packed, 128)  # lane-dense output stores

    # ---- glue: layouts -----------------------------------------------------
    # x: NCHW -> [M, Cin], rows ordered (n, h, w); zero-pad rows to m_pad
    # (zero rows contribute nothing to colsum / Gram; their output is sliced).
    x2d = jnp.transpose(x, (0, 2, 3, 1)).reshape(M, Cin)
    x2d = jnp.pad(x2d, ((0, m_pad - M), (0, 0))).astype(compute_dtype)
    # Weight [Cin, Cout, 2, 2] -> packed [Cin, 4*Cout], column = (ki*2+kj)*Cout + c.
    w_packed = jnp.transpose(w_t, (0, 2, 3, 1)).reshape(Cin, n_packed).astype(compute_dtype)

    # ---- pass 1: BN statistics (reads x once; tiny outputs) ----------------
    colsum, gram = pl.pallas_call(
        _stats_kernel,
        out_shape=(
            jax.ShapeDtypeStruct((1, Cin), jnp.float32),
            jax.ShapeDtypeStruct((Cin, Cin), jnp.float32),
        ),
        grid=(mt,),
        in_specs=[pl.BlockSpec((tm, Cin), lambda i: (i, 0))],
        out_specs=(
            pl.BlockSpec((1, Cin), lambda i: (0, 0)),
            pl.BlockSpec((Cin, Cin), lambda i: (0, 0)),
        ),
        compiler_params=pltpu.CompilerParams(
            dimension_semantics=("arbitrary",),  # accumulator over the M axis
        ),
    )(x2d)

    # ---- BN scale/shift from algebraic stats (tiny, plain JAX) -------------
    w_f32 = w_packed.astype(jnp.float32)          # same rounding the GEMM sees
    s_all = (colsum @ w_f32).reshape(4, Cout)                      # per-tap sums
    ss_all = jnp.sum(w_f32 * (gram @ w_f32), axis=0).reshape(4, Cout)  # per-tap sumsq
    count = jnp.float32(4 * M)
    mean = s_all.sum(0) / count
    var = jnp.maximum(ss_all.sum(0) / count - mean * mean, 0.0)
    inv = jax.lax.rsqrt(var + EPS)
    scale = gamma.astype(jnp.float32) * inv
    shift = beta.astype(jnp.float32) - mean * scale
    # Tile per-channel scale/shift to the tap-packed column order, pad to n_pad.
    scale_p = jnp.pad(jnp.tile(scale, 4), (0, n_pad - n_packed)).reshape(1, n_pad)
    shift_p = jnp.pad(jnp.tile(shift, 4), (0, n_pad - n_packed)).reshape(1, n_pad)
    w_pad = jnp.pad(w_packed, ((0, 0), (0, n_pad - n_packed)))

    # ---- pass 2: tap-packed GEMM + fused BN/ReLU, output written once ------
    bytes_per_step = (
        tm * Cin * jnp.dtype(compute_dtype).itemsize
        + Cin * n_pad * jnp.dtype(compute_dtype).itemsize
        + tm * n_pad * 4
    )
    # Double-buffered inputs/outputs + headroom; keep below v7x physical VMEM.
    vmem_limit = int(min(max(2 * bytes_per_step + (4 << 20), 16 << 20), 48 << 20))

    out2d = pl.pallas_call(
        _gemm_bn_relu_kernel,
        out_shape=jax.ShapeDtypeStruct((m_pad, n_pad), jnp.float32),
        grid=(mt,),
        in_specs=[
            pl.BlockSpec((tm, Cin), lambda i: (i, 0)),
            pl.BlockSpec((Cin, n_pad), lambda i: (0, 0)),
            pl.BlockSpec((1, n_pad), lambda i: (0, 0)),
            pl.BlockSpec((1, n_pad), lambda i: (0, 0)),
        ],
        out_specs=pl.BlockSpec((tm, n_pad), lambda i: (i, 0)),
        compiler_params=pltpu.CompilerParams(
            dimension_semantics=("parallel",),  # row tiles split across TCs (v7x)
            vmem_limit_bytes=vmem_limit,
        ),
    )(x2d, w_pad, scale_p, shift_p)

    # ---- glue: scatter taps back to NCHW [N, Cout, 2H, 2W] ------------------
    # TODO(synk): the final NCHW relayout is one XLA transpose; writing NCHW
    # directly from the kernel would need lane-sparse interleaved stores
    # (kj interleaves with w), so it is left to XLA.
    out = out2d[:M, :n_packed].reshape(N, H, W, 2, 2, Cout)   # [n,h,w,ki,kj,c]
    out = jnp.transpose(out, (0, 5, 1, 3, 2, 4))              # [n,c,h,ki,w,kj]
    return out.reshape(N, Cout, 2 * H, 2 * W)


def reference_forward(x, w_t, b, gamma, beta):
    """Pure-JAX f32 reference: ConvTranspose2d(k=2,s=2,bias)+BN(train)+ReLU, NCHW."""
    N, Cin, H, W = x.shape
    Cout = w_t.shape[1]
    y = jnp.einsum("ncij,coab->noiajb", x, w_t)               # [N,Cout,H,2,W,2]
    y = y.reshape(N, Cout, 2 * H, 2 * W) + b[None, :, None, None]
    mean = jnp.mean(y, axis=(0, 2, 3), keepdims=True)
    var = jnp.mean((y - mean) ** 2, axis=(0, 2, 3), keepdims=True)
    yhat = (y - mean) * jax.lax.rsqrt(var + EPS)
    out = yhat * gamma[None, :, None, None] + beta[None, :, None, None]
    return jnp.maximum(out, 0.0)


if __name__ == "__main__":
    key = jax.random.PRNGKey(0)
    N, Cin, H, W = 2, 4, 16, 16
    Cout = 8

    kx, kw, kb = jax.random.split(key, 3)
    x = jax.random.normal(kx, (N, Cin, H, W), dtype=jnp.float32)
    # ConvTranspose2d weight shape: [in_channels, out_channels, kH, kW]
    w_t = jax.random.normal(kw, (Cin, Cout, 2, 2), dtype=jnp.float32) * 0.1
    b = jax.random.normal(kb, (Cout,), dtype=jnp.float32) * 0.1
    gamma = jnp.ones((Cout,), jnp.float32)   # BatchNorm2d default affine init
    beta = jnp.zeros((Cout,), jnp.float32)

    ref = reference_forward(x, w_t, b, gamma, beta)

    # Default bf16-MXU path, multi-tile grid over M (M=512, tm=128 -> 4 tiles).
    fwd_bf16 = jax.jit(functools.partial(deconv2d_bn_forward, tm=128))
    out = fwd_bf16(x, w_t, b, gamma, beta)
    jax.block_until_ready(out)
    assert out.shape == (N, Cout, 2 * H, 2 * W)
    err_bf16 = float(jnp.max(jnp.abs(out - ref)))
    # bf16 MXU inputs vs an all-f32 reference -> bf16-level tolerance.
    assert jnp.allclose(out, ref, atol=5e-2, rtol=5e-2), err_bf16

    # f32 compute path: tight check of the algebraic-BN / tap-packed GEMM math.
    fwd_f32 = jax.jit(
        functools.partial(deconv2d_bn_forward, tm=256, compute_dtype=jnp.float32)
    )
    out32 = fwd_f32(x, w_t, b, gamma, beta)
    jax.block_until_ready(out32)
    err_f32 = float(jnp.max(jnp.abs(out32 - ref)))
    assert jnp.allclose(out32, ref, atol=1e-3, rtol=1e-3), err_f32

    print("KERNEL_OK")
</pallas_src>

<mosaic_0001>
module attributes {stable_mosaic.version = 11 : i64} {
  func.func @_stats_kernel(%arg0: i32, %arg1: memref<128x4xbf16, #tpu.memory_space<vmem>>, %arg2: memref<1x4xf32, #tpu.memory_space<vmem>>, %arg3: memref<4x4xf32, #tpu.memory_space<vmem>>) attributes {dimension_semantics = [#tpu.dimension_semantics<arbitrary>], iteration_bounds = array<i64: 4>, scalar_prefetch = 0 : i64, scratch_operands = 0 : i64, tpu.core_type = #tpu.core_type<tc>, window_params = [{transform_indices = @transform_0, window_bounds = array<i64: 128, 4>}, {pipeline_mode = #tpu.pipeline_mode<synchronous>, transform_indices = @transform_1, window_bounds = array<i64: 1, 4>}, {pipeline_mode = #tpu.pipeline_mode<synchronous>, transform_indices = @transform_2, window_bounds = array<i64: 4, 4>}]} {
    %c0_i32 = arith.constant 0 : i32
    %0 = arith.cmpi eq, %arg0, %c0_i32 : i32
    %1 = arith.extui %0 : i1 to i32
    %c0_i32_0 = arith.constant 0 : i32
    %2 = arith.cmpi ne, %1, %c0_i32_0 : i32
    scf.if %2 {
      %cst_11 = arith.constant 0.000000e+00 : f32
      %14 = vector.broadcast %cst_11 : f32 to vector<1x4xf32>
      %c0_12 = arith.constant 0 : index
      %c0_13 = arith.constant 0 : index
      %15 = vector.load %arg2[%c0_12, %c0_13] : memref<1x4xf32, #tpu.memory_space<vmem>>, vector<1x4xf32>
      tpu.vector_store %arg2[%c0_12, %c0_13], %14 {strides = array<i32>} : memref<1x4xf32, #tpu.memory_space<vmem>>, vector<1x4xf32>,
      %cst_14 = arith.constant 0.000000e+00 : f32
      %16 = vector.broadcast %cst_14 : f32 to vector<4x4xf32>
      %c0_15 = arith.constant 0 : index
      %c0_16 = arith.constant 0 : index
      %17 = vector.load %arg3[%c0_15, %c0_16] : memref<4x4xf32, #tpu.memory_space<vmem>>, vector<4x4xf32>
      tpu.vector_store %arg3[%c0_15, %c0_16], %16 {strides = array<i32>} : memref<4x4xf32, #tpu.memory_space<vmem>>, vector<4x4xf32>,
    } else {
    }
    %c0 = arith.constant 0 : index
    %c0_1 = arith.constant 0 : index
    %3 = vector.load %arg1[%c0, %c0_1] : memref<128x4xbf16, #tpu.memory_space<vmem>>, vector<128x4xbf16>
    %c0_2 = arith.constant 0 : index
    %c0_3 = arith.constant 0 : index
    %4 = vector.load %arg2[%c0_2, %c0_3] : memref<1x4xf32, #tpu.memory_space<vmem>>, vector<1x4xf32>
    %5 = arith.extf %3 : vector<128x4xbf16> to vector<128x4xf32>
    %cst = arith.constant dense<0.000000e+00> : vector<4xf32>
    %6 = vector.multi_reduction <add>, %5, %cst [0] : vector<128x4xf32> to vector<4xf32>
    %7 = vector.shape_cast %6 : vector<4xf32> to vector<1x4xf32>
    %8 = arith.addf %4, %7 : vector<1x4xf32>
    %c0_4 = arith.constant 0 : index
    %c0_5 = arith.constant 0 : index
    %9 = vector.load %arg2[%c0_4, %c0_5] : memref<1x4xf32, #tpu.memory_space<vmem>>, vector<1x4xf32>
    tpu.vector_store %arg2[%c0_4, %c0_5], %8 {strides = array<i32>} : memref<1x4xf32, #tpu.memory_space<vmem>>, vector<1x4xf32>,
    %c0_6 = arith.constant 0 : index
    %c0_7 = arith.constant 0 : index
    %10 = vector.load %arg3[%c0_6, %c0_7] : memref<4x4xf32, #tpu.memory_space<vmem>>, vector<4x4xf32>
    %cst_8 = arith.constant dense<0.000000e+00> : vector<4x4xf32>
    %11 = tpu.matmul %3, %3, %cst_8 {dimension_numbers = #tpu.dot_dimension_numbers<[0], [0], [1], [1], [0, 1, 1, 1], [], []>} : vector<128x4xbf16>, vector<128x4xbf16>, vector<4x4xf32> -> vector<4x4xf32>
    %12 = arith.addf %10, %11 : vector<4x4xf32>
    %c0_9 = arith.constant 0 : index
    %c0_10 = arith.constant 0 : index
    %13 = vector.load %arg3[%c0_9, %c0_10] : memref<4x4xf32, #tpu.memory_space<vmem>>, vector<4x4xf32>
    tpu.vector_store %arg3[%c0_9, %c0_10], %12 {strides = array<i32>} : memref<4x4xf32, #tpu.memory_space<vmem>>, vector<4x4xf32>,
    return
  }
  func.func @transform_0(%arg0: i32) -> (i32, i32) {
    %c0_i32 = arith.constant 0 : i32
    %c0_i32_0 = arith.constant 0 : i32
    return %arg0, %c0_i32 : i32, i32
  }
  func.func @transform_1(%arg0: i32) -> (i32, i32) {
    %c0_i32 = arith.constant 0 : i32
    %c0_i32_0 = arith.constant 0 : i32
    %c0_i32_1 = arith.constant 0 : i32
    return %c0_i32, %c0_i32_0 : i32, i32
  }
  func.func @transform_2(%arg0: i32) -> (i32, i32) {
    %c0_i32 = arith.constant 0 : i32
    %c0_i32_0 = arith.constant 0 : i32
    %c0_i32_1 = arith.constant 0 : i32
    return %c0_i32, %c0_i32_0 : i32, i32
  }
}

module attributes {stable_mosaic.version = 11 : i64} {
  func.func @_gemm_bn_relu_kernel(%arg0: i32, %arg1: memref<128x4xbf16, #tpu.memory_space<vmem>>, %arg2: memref<4x128xbf16, #tpu.memory_space<vmem>>, %arg3: memref<1x128xf32, #tpu.memory_space<vmem>>, %arg4: memref<1x128xf32, #tpu.memory_space<vmem>>, %arg5: memref<128x128xf32, #tpu.memory_space<vmem>>) attributes {dimension_semantics = [#tpu.dimension_semantics<parallel>], iteration_bounds = array<i64: 4>, scalar_prefetch = 0 : i64, scratch_operands = 0 : i64, tpu.core_type = #tpu.core_type<tc>, window_params = [{transform_indices = @transform_0, window_bounds = array<i64: 128, 4>}, {pipeline_mode = #tpu.pipeline_mode<synchronous>, transform_indices = @transform_1, window_bounds = array<i64: 4, 128>}, {pipeline_mode = #tpu.pipeline_mode<synchronous>, transform_indices = @transform_2, window_bounds = array<i64: 1, 128>}, {pipeline_mode = #tpu.pipeline_mode<synchronous>, transform_indices = @transform_3, window_bounds = array<i64: 1, 128>}, {transform_indices = @transform_4, window_bounds = array<i64: 128, 128>}]} {
    %c0 = arith.constant 0 : index
    %c0_0 = arith.constant 0 : index
    %0 = vector.load %arg1[%c0, %c0_0] : memref<128x4xbf16, #tpu.memory_space<vmem>>, vector<128x4xbf16>
    %c0_1 = arith.constant 0 : index
    %c0_2 = arith.constant 0 : index
    %1 = vector.load %arg2[%c0_1, %c0_2] : memref<4x128xbf16, #tpu.memory_space<vmem>>, vector<4x128xbf16>
    %cst = arith.constant dense<0.000000e+00> : vector<128x128xf32>
    %2 = tpu.matmul %0, %1, %cst {dimension_numbers = #tpu.dot_dimension_numbers<[1], [0], [0], [1], [0, 0, 1, 1], [], []>} : vector<128x4xbf16>, vector<4x128xbf16>, vector<128x128xf32> -> vector<128x128xf32>
    %c0_3 = arith.constant 0 : index
    %c0_4 = arith.constant 0 : index
    %3 = vector.load %arg3[%c0_3, %c0_4] : memref<1x128xf32, #tpu.memory_space<vmem>>, vector<1x128xf32>
    %4 = vector.broadcast %3 : vector<1x128xf32> to vector<128x128xf32>
    %5 = arith.mulf %2, %4 : vector<128x128xf32>
    %c0_5 = arith.constant 0 : index
    %c0_6 = arith.constant 0 : index
    %6 = vector.load %arg4[%c0_5, %c0_6] : memref<1x128xf32, #tpu.memory_space<vmem>>, vector<1x128xf32>
    %7 = vector.broadcast %6 : vector<1x128xf32> to vector<128x128xf32>
    %8 = arith.addf %5, %7 : vector<128x128xf32>
    %cst_7 = arith.constant 0.000000e+00 : f32
    %9 = vector.broadcast %cst_7 : f32 to vector<128x128xf32>
    %10 = arith.maximumf %8, %9 : vector<128x128xf32>
    %c0_8 = arith.constant 0 : index
    %c0_9 = arith.constant 0 : index
    %11 = vector.load %arg5[%c0_8, %c0_9] : memref<128x128xf32, #tpu.memory_space<vmem>>, vector<128x128xf32>
    tpu.vector_store %arg5[%c0_8, %c0_9], %10 {strides = array<i32>} : memref<128x128xf32, #tpu.memory_space<vmem>>, vector<128x128xf32>,
    return
  }
  func.func @transform_0(%arg0: i32) -> (i32, i32) {
    %c0_i32 = arith.constant 0 : i32
    %c0_i32_0 = arith.constant 0 : i32
    return %arg0, %c0_i32 : i32, i32
  }
  func.func @transform_1(%arg0: i32) -> (i32, i32) {
    %c0_i32 = arith.constant 0 : i32
    %c0_i32_0 = arith.constant 0 : i32
    %c0_i32_1 = arith.constant 0 : i32
    return %c0_i32, %c0_i32_0 : i32, i32
  }
  func.func @transform_2(%arg0: i32) -> (i32, i32) {
    %c0_i32 = arith.constant 0 : i32
    %c0_i32_0 = arith.constant 0 : i32
    %c0_i32_1 = arith.constant 0 : i32
    return %c0_i32, %c0_i32_0 : i32, i32
  }
  func.func @transform_3(%arg0: i32) -> (i32, i32) {
    %c0_i32 = arith.constant 0 : i32
    %c0_i32_0 = arith.constant 0 : i32
    %c0_i32_1 = arith.constant 0 : i32
    return %c0_i32, %c0_i32_0 : i32, i32
  }
  func.func @transform_4(%arg0: i32) -> (i32, i32) {
    %c0_i32 = arith.constant 0 : i32
    %c0_i32_0 = arith.constant 0 : i32
    return %arg0, %c0_i32 : i32, i32
  }
}

</mosaic_0001>

<llo_original>
// kernel: tile.18
$region0: #{tile.18}
  #allocation0 [shape = 's32[1]{0}', space=sflag, size = 0x4, scoped, tag = 'scoped memory for tile.18']
  %s0 = inlined_call_operand.vmem [shape: f32[8], index: 0, kind: input, shape index: {}]
  %s1 = inlined_call_operand.vmem [shape: f32[4,8], index: 1, kind: output, shape index: {}]
  // Predicated region
  $region2: #{tile.18} parent=0 // pred_check
    _
  $region3: #{tile.18} parent=0 // pred_check_branch
    %3 = sbr.rel (0) target = $region5
  $region4: #{tile.18} parent=0 // pred_region
    _
  $region5: #{tile.18} parent=0 // pred_fallthru
    _
  %v4 = vld [vmem:[%s0] ss:$0 sm:$0xff]
  %5 = vst [vmem:[%s1] sm:$0xf] %v4

// kernel: tile.19
$region0: #{tile.19}
  %s0 = inlined_call_operand.vmem [shape: f32[4,8], index: 0, kind: input, shape index: {}]
  %s1 = inlined_call_operand.vmem [shape: f32[32], index: 1, kind: output, shape index: {}]
  $region1: #{tile.19} parent=0
    #allocation0 [shape = 'u8[4096]{0}', space=vmem, size = 0x1000, scoped, tag = 'scoped mem for output reshape']
    #allocation1 [shape = 'u8[4096]{0}', space=vmem, size = 0x1000, scoped, tag = 'scoped mem for input reshape']
    %s3 = sshllo.u32 0, 4
    %v4 = vld [vmem:[%s0] sm:%s3]
    %5 = vst [vmem:[#allocation1] sm:%s3] %v4
    %v6 = vld [vmem:[#allocation1] sm:$0x1]
    %vm7 = vcmask 64512
    %8 = vst.msk [vmem:[#allocation0] sm:$0x1] %vm7, %v6
    %s9 = scalar_lea.vmem [#allocation1], 3
    %v10 = vld [vmem:[%s9] sm:$0x1]
    %11 = vrot.lane.b32.xlu0 %v10, 24
    %v12 = vpop.permute.xlu0 %11
    %vm13 = vcmask 261312
    %14 = vst.msk [vmem:[#allocation0] sm:$0x1] %vm13, %v12
    %s15 = scalar_lea.vmem [#allocation1], 2
    %v16 = vld [vmem:[%s15] sm:$0x1]
    %17 = vrot.lane.b32.xlu0 %v16, 16
    %v18 = vpop.permute.xlu0 %17
    %vm19 = vcmask 195712
    %20 = vst.msk [vmem:[#allocation0] sm:$0x1] %vm19, %v18
    %s21 = scalar_lea.vmem [#allocation1], 1
    %v22 = vld [vmem:[%s21] sm:$0x1]
    %23 = vrot.lane.b32.xlu0 %v22, 8
    %v24 = vpop.permute.xlu0 %23
    %vm25 = vcmask 130112
    %26 = vst.msk [vmem:[#allocation0] sm:$0x1] %vm25, %v24
    %s28 = sshllo.u32 0, 1
    %v30 = vld [vmem:[#allocation0] sm:%s28]
    %s31 = sshllo.u32 0, 1
    %32 = vst [vmem:[%s1] sm:%s31] %v30

// kernel: deconv2d_bn_forward.2
$region0: #{deconv2d_bn_forward.2}
  #allocation0 [shape = 'u32[]', space=smem, size = 0x4, offset = 0x4, fixed_abs, tag = 'smem constant byte address 0x4 - core index']
  #allocation1 [shape = 'u32[144,128]{1,0:T(1,128)}', space=vmem, size = 0x12000, scoped, tag = 'internal scratch']
  %s0 = inlined_call_operand.vmem [shape: bf16[512,4], index: 0, kind: input, shape index: {}]
  %s1 = inlined_call_operand.vmem [shape: f32[1,4], index: 1, kind: output, shape index: {0}]
  %s2 = inlined_call_operand.vmem [shape: f32[4,4], index: 2, kind: output, shape index: {1}]
  %3 = xla_tuple %s1, %s2
  %s4 = sld [smem:[#allocation0]]
  $region49: #{deconv2d_bn_forward.2} parent=0
    _
  %s6 = ssub.s32 1, %s4
  %s7 = scalar_select 0, %s6, %s4
  loop: start=0, step=1, limit=6
  $region2: #{deconv2d_bn_forward.2} parent=0 // loop_pre_header
    _
  $region3: #{deconv2d_bn_forward.2} parent=0 // loop_header
    %s9 = sphi 0, %s13
    %p10 = scmp.ge.s32.totalorder %s9, 6
    %s19 = sphi 0, %s21
    %s22 = sphi 0, %s19
    %s23 = sphi 0, %s22
    %s39 = sphi 0, %s23
    %s43 = sphi 0, %s43
    %s45 = sphi 0, %s43
    %s46 = sphi 0, %s45
    %s60 = sphi 0, %s46
    %s64 = sphi 0, %s64
    %s66 = sphi 0, %s64
    %s67 = sphi 0, %s66
    %s81 = sphi 0, %s67
  $region4: #{deconv2d_bn_forward.2} parent=0 // loop_header_branch
    %12 = sbr.rel (%p10) target = $region8
  $region5: #{deconv2d_bn_forward.2} parent=0 // loop_body
    %s14 = ssub.s32 %s9, 1
    %s15 = ssub.s32 %s9, 2
    %s16 = sadd.s32 %s9, 1
    %s17 = ssub.s32 %s9, %s16
    %p18 = scmp.eq.s32.totalorder %s17, 0
    %s20 = sadd.s32 %s19, 1
    %s21 = scalar_select %p18, %s19, %s20
    %p24 = pneg %p18
    %p25 = scmp.eq.s32.totalorder %s9, 3
    %p26 = por %p24, %p25
    %p27 = scmp.ne.s32.totalorder %s19, %s22
    %p28 = scmp.eq.s32.totalorder %s9, 0
    %p29 = por %p27, %p28
    %p30 = scmp.ne.s32.totalorder %s19, %s22
    %p31 = scmp.eq.s32.totalorder %s14, 3
    %p32 = por %p30, %p31
    %p33 = scmp.ne.s32.totalorder %s22, %s23
    %p34 = scmp.eq.s32.totalorder %s14, 0
    %p35 = por %p33, %p34
    %p36 = scmp.ne.s32.totalorder %s22, %s23
    %p37 = scmp.eq.s32.totalorder %s15, 3
    %p38 = por %p36, %p37
    %p40 = scmp.ne.s32.totalorder %s23, %s39
    %p41 = scmp.eq.s32.totalorder %s15, 0
    %p42 = por %p40, %p41
    %s44 = sadd.s32 %s43, 1
    %p47 = scmp.eq.s32.totalorder %s9, 3
    %p48 = scmp.ne.s32.totalorder %s43, %s45
    %p49 = scmp.eq.s32.totalorder %s9, 0
    %p50 = por %p48, %p49
    %p51 = scmp.ne.s32.totalorder %s43, %s45
    %p52 = scmp.eq.s32.totalorder %s14, 3
    %p53 = por %p51, %p52
    %p54 = scmp.ne.s32.totalorder %s45, %s46
    %p55 = scmp.eq.s32.totalorder %s14, 0
    %p56 = por %p54, %p55
    %p57 = scmp.ne.s32.totalorder %s45, %s46
    %p58 = scmp.eq.s32.totalorder %s15, 3
    %p59 = por %p57, %p58
    %p61 = scmp.ne.s32.totalorder %s46, %s60
    %p62 = scmp.eq.s32.totalorder %s15, 0
    %p63 = por %p61, %p62
    %s65 = sadd.s32 %s64, 1
    %p68 = scmp.eq.s32.totalorder %s9, 3
    %p69 = scmp.ne.s32.totalorder %s64, %s66
    %p70 = scmp.eq.s32.totalorder %s9, 0
    %p71 = por %p69, %p70
    %p72 = scmp.ne.s32.totalorder %s64, %s66
    %p73 = scmp.eq.s32.totalorder %s14, 3
    %p74 = por %p72, %p73
    %p75 = scmp.ne.s32.totalorder %s66, %s67
    %p76 = scmp.eq.s32.totalorder %s14, 0
    %p77 = por %p75, %p76
    %p78 = scmp.ne.s32.totalorder %s66, %s67
    %p79 = scmp.eq.s32.totalorder %s15, 3
    %p80 = por %p78, %p79
    %p82 = scmp.ne.s32.totalorder %s67, %s81
    %p83 = scmp.eq.s32.totalorder %s15, 0
    %p84 = por %p82, %p83
    %p85 = scmp.le.s32.totalorder 1, %s9
    %p86 = scmp.lt.s32.totalorder %s9, 5
    %p87 = pnand %p85, %p86
    %p88 = pneg %p87
    // Predicated region
    $region9: #{deconv2d_bn_forward.2} parent=5 // pred_check
      _
    $region10: #{deconv2d_bn_forward.2} parent=5 // pred_check_branch
      %90 = sbr.rel (%p87) target = $region12
    $region11: #{deconv2d_bn_forward.2} parent=5 // pred_region
      %s91 = ssub.s32 %s9, 1
    $region12: #{deconv2d_bn_forward.2} parent=5 // pred_fallthru
      _
    %p92 = scmp.lt.s32.totalorder %s9, 4
    // Predicated region
    $region13: #{deconv2d_bn_forward.2} parent=5 // pred_check
      %p93 = pneg %p92
    $region14: #{deconv2d_bn_forward.2} parent=5 // pred_check_branch
      %95 = sbr.rel (%p93) target = $region16
    $region15: #{deconv2d_bn_forward.2} parent=5 // pred_region
      // Predicated region
      $region17: #{deconv2d_bn_forward.2} parent=15 // pred_check
        %p96 = pneg %p29
      $region18: #{deconv2d_bn_forward.2} parent=15 // pred_check_branch
        %98 = sbr.rel (%p96) target = $region20
      $region19: #{deconv2d_bn_forward.2} parent=15 // pred_region
        %s99 = smul.u32 16, %s9
        %p100 = scmp.lt.s32.totalorder %s99, 63
        %s101 = scalar_select %p100, %s99, 63
        %s102 = smul.addr %s101, 4
        %s103 = scalar_lea.vmem %s0, %s102
        %s104 = smul.u32 16, %s9
      $region20: #{deconv2d_bn_forward.2} parent=15 // pred_fallthru
        _
    $region16: #{deconv2d_bn_forward.2} parent=5 // pred_fallthru
      _
    %p105 = scmp.le.s32.totalorder 1, %s9
    %p106 = scmp.lt.s32.totalorder %s9, 5
    %p107 = pnand %p105, %p106
    %p108 = pneg %p107
    // Predicated region
    $region21: #{deconv2d_bn_forward.2} parent=5 // pred_check
      _
    $region22: #{deconv2d_bn_forward.2} parent=5 // pred_check_branch
      %110 = sbr.rel (%p107) target = $region24
    $region23: #{deconv2d_bn_forward.2} parent=5 // pred_region
      %s111 = ssub.s32 %s9, 1
      %s112 = smul.u32 16, %s14
      %p113 = scmp.lt.s32.totalorder %s112, 63
      %s114 = scalar_select %p113, %s112, 63
      %s115 = smul.addr %s114, 4
      %s116 = scalar_lea.vmem %s0, %s115
      %p117 = pneg %p35
      %p118 = pneg %p32
      %p119 = pneg %p56
      %p120 = pneg %p53
      %p121 = pneg %p77
      %p122 = pneg %p74
      %s123 = smul.u32 16, %s14
      %p124 = scmp.lt.s32.totalorder %s123, 63
      %s125 = scalar_select %p124, %s123, 63
      %s126 = smul.addr %s125, 4
      %s127 = scalar_lea.vmem %s0, %s126
      %s128 = smul.u32 16, %s14
      %p130 = scmp.eq.s32.totalorder %s14, 0
      // Predicated region
      $region25: #{deconv2d_bn_forward.2} parent=23 // pred_check
        %p131 = pneg %p130
      $region26: #{deconv2d_bn_forward.2} parent=23 // pred_check_branch
        %133 = sbr.rel (%p131) target = $region28
      $region27: #{deconv2d_bn_forward.2} parent=23 // pred_region
        %vm134 = vcmask 24576
        %135 = vst.msk [vmem:[%s1] sm:$0x1] %vm134, 0.0
        %vm136 = vcmask 27648
        %137 = vst.msk [vmem:[%s2] sm:$0xf] %vm136, 0.0
      $region28: #{deconv2d_bn_forward.2} parent=23 // pred_fallthru
        _
      %v138 = vld [vmem:[%s127] sm:$0xf]
      %v139 = vld [vmem:[%s127 + $0x4] sm:$0xf]
      %v140 = vld [vmem:[%s127 + $0x8] sm:$0xf]
      %v141 = vld [vmem:[%s127 + $0xc] sm:$0xf]
      %v142 = vld [vmem:[%s127 + $0x10] sm:$0xf]
      %v143 = vld [vmem:[%s127 + $0x14] sm:$0xf]
      %v144 = vld [vmem:[%s127 + $0x18] sm:$0xf]
      %v145 = vld [vmem:[%s127 + $0x1c] sm:$0xf]
      %v146 = vld [vmem:[%s127 + $0x20] sm:$0xf]
      %v147 = vld [vmem:[%s127 + $0x24] sm:$0xf]
      %v148 = vld [vmem:[%s127 + $0x28] sm:$0xf]
      %v149 = vld [vmem:[%s127 + $0x2c] sm:$0xf]
      %v150 = vld [vmem:[%s127 + $0x30] sm:$0xf]
      %v151 = vld [vmem:[%s127 + $0x34] sm:$0xf]
      %v152 = vld [vmem:[%s127 + $0x38] sm:$0xf]
      %v153 = vld [vmem:[%s127 + $0x3c] sm:$0xf]
      %v154 = vld [vmem:[%s1] sm:$0x1]
      %v155 = vunpack.c.l.bf16 %v138
      %v156 = vunpack.c.l.bf16 %v139
      %v157 = vunpack.c.l.bf16 %v140
      %v158 = vunpack.c.l.bf16 %v141
      %v159 = vunpack.c.l.bf16 %v142
      %v160 = vunpack.c.l.bf16 %v143
      %v161 = vunpack.c.l.bf16 %v144
      %v162 = vunpack.c.l.bf16 %v145
      %v163 = vunpack.c.l.bf16 %v146
      %v164 = vunpack.c.l.bf16 %v147
      %v165 = vunpack.c.l.bf16 %v148
      %v166 = vunpack.c.l.bf16 %v149
      %v167 = vunpack.c.l.bf16 %v150
      %v168 = vunpack.c.l.bf16 %v151
      %v169 = vunpack.c.l.bf16 %v152
      %v170 = vunpack.c.l.bf16 %v153
      %vm171 = vcmask 31744
      %v172 = vsel %vm171, %v155, 0.0
      %v173 = vsel %vm171, %v156, 0.0
      %v174 = vadd.f32 %v172, %v173
      %v175 = vsel %vm171, %v157, 0.0
      %v176 = vadd.f32 %v174, %v175
      %v177 = vsel %vm171, %v158, 0.0
      %v178 = vadd.f32 %v176, %v177
      %v179 = vsel %vm171, %v159, 0.0
      %v180 = vadd.f32 %v178, %v179
      %v181 = vsel %vm171, %v160, 0.0
      %v182 = vadd.f32 %v180, %v181
      %v183 = vsel %vm171, %v161, 0.0
      %v184 = vadd.f32 %v182, %v183
      %v185 = vsel %vm171, %v162, 0.0
      %v186 = vadd.f32 %v184, %v185
      %v187 = vsel %vm171, %v163, 0.0
      %v188 = vadd.f32 %v186, %v187
      %v189 = vsel %vm171, %v164, 0.0
      %v190 = vadd.f32 %v188, %v189
      %v191 = vsel %vm171, %v165, 0.0
      %v192 = vadd.f32 %v190, %v191
      %v193 = vsel %vm171, %v166, 0.0
      %v194 = vadd.f32 %v192, %v193
      %v195 = vsel %vm171, %v167, 0.0
      %v196 = vadd.f32 %v194, %v195
      %v197 = vsel %vm171, %v168, 0.0
      %v198 = vadd.f32 %v196, %v197
      %v199 = vsel %vm171, %v169, 0.0
      %v200 = vadd.f32 %v198, %v199
      %v201 = vsel %vm171, %v170, 0.0
      %v202 = vadd.f32 %v200, %v201
      %v203 = vrot.slane %v202, 4
      %v204 = vadd.f32 %v202, %v203
      %v205 = vrot.slane %v204, 2
      %v206 = vadd.f32 %v204, %v205
      %v207 = vrot.slane %v206, 1
      %v208 = vadd.f32 %v206, %v207
      %v209 = vadd.f32 %v154, %v208
      %vm210 = vcmask 24576
      %211 = vst.msk [vmem:[%s1] sm:$0x1] %vm210, %v209
      %v212 = vld [vmem:[%s2] sm:$0xf]
      %v229 = vunpack.c.l.b16 %v138
      %v230 = vunpack.c.l.b16 %v139
      %v231 = vunpack.c.l.b16 %v140
      %v232 = vunpack.c.l.b16 %v141
      %v233 = vunpack.c.l.b16 %v142
      %v234 = vunpack.c.l.b16 %v143
      %v235 = vunpack.c.l.b16 %v144
      %v236 = vunpack.c.l.b16 %v145
      %v237 = vunpack.c.l.b16 %v146
      %v238 = vunpack.c.l.b16 %v147
      %v239 = vunpack.c.l.b16 %v148
      %v240 = vunpack.c.l.b16 %v149
      %v241 = vunpack.c.l.b16 %v150
      %v242 = vunpack.c.l.b16 %v151
      %v243 = vunpack.c.l.b16 %v152
      %v244 = vunpack.c.l.b16 %v153
      %v245 = vpack.c.b16 %v230, %v229
      %v246 = vpack.c.b16 %v232, %v231
      %v247 = vpack.c.b16 %v234, %v233
      %v248 = vpack.c.b16 %v236, %v235
      %v249 = vpack.c.b16 %v238, %v237
      %v250 = vpack.c.b16 %v240, %v239
      %v251 = vpack.c.b16 %v242, %v241
      %v252 = vpack.c.b16 %v244, %v243
      %261 = vxpose.xlu0.c.b16.start [1/8] %v245, 128
      %262 = vxpose.xlu0.c.b16.cont [2/8] %v246, 128
      %263 = vxpose.xlu0.c.b16.cont [3/8] %v247, 128
      %264 = vxpose.xlu0.c.b16.cont [4/8] %v248, 128
      %265 = vxpose.xlu0.c.b16.cont [5/8] %v249, 128
      %266 = vxpose.xlu0.c.b16.cont [6/8] %v250, 128
      %267 = vxpose.xlu0.c.b16.cont [7/8] %v251, 128
      %268 = vxpose.xlu0.c.b16.end [8/8] %v252, 128
      %v269 = vpop.trf.xlu0
      %v270 = vpop.trf.xlu0
      %v271 = vpop.trf.xlu0
      %v272 = vpop.trf.xlu0
      %v273 = vpop.trf.xlu0
      %v274 = vpop.trf.xlu0
      %v275 = vpop.trf.xlu0
      %v276 = vpop.trf.xlu0
      %277 = vmatprep.subr.bf16.mxu0 0
      %278 = vmatpush1.bf16.msra.mxu0 %v245
      %279 = vmatprep.subr.bf16.mxu0 0
      %280 = vmatpush1.bf16.msra.mxu0 %v246
      %281 = vmatprep.subr.bf16.mxu0 0
      %282 = vmatpush1.bf16.msra.mxu0 %v247
      %283 = vmatprep.subr.bf16.mxu0 0
      %284 = vmatpush1.bf16.msra.mxu0 %v248
      %285 = vmatprep.subr.bf16.mxu0 0
      %286 = vmatpush1.bf16.msra.mxu0 %v249
      %287 = vmatprep.subr.bf16.mxu0 0
      %288 = vmatpush1.bf16.msra.mxu0 %v250
      %289 = vmatprep.subr.bf16.mxu0 0
      %290 = vmatpush1.bf16.msra.mxu0 %v251
      %291 = vmatprep.subr.bf16.mxu0 0
      %292 = vmatpush1.bf16.msra.mxu0 %v252
      %293 = vmatprep.subr.bf16.mxu0 0
      %294 = vmatpush1.bf16.msra.mxu0 0
      %295 = vmatprep.subr.bf16.mxu0 0
      %296 = vmatpush1.bf16.msra.mxu0 0
      %297 = vmatprep.subr.bf16.mxu0 0
      %298 = vmatpush1.bf16.msra.mxu0 0
      %299 = vmatprep.subr.bf16.mxu0 0
      %300 = vmatpush1.bf16.msra.mxu0 0
      %301 = vmatprep.subr.bf16.mxu0 0
      %302 = vmatpush1.bf16.msra.mxu0 0
      %303 = vmatprep.subr.bf16.mxu0 0
      %304 = vmatpush1.bf16.msra.mxu0 0
      %305 = vmatprep.subr.bf16.mxu0 0
      %306 = vmatpush1.bf16.msra.mxu0 0
      %307 = vmatprep.subr.bf16.mxu0 0
      %308 = vmatpush1.bf16.msra.mxu0 0
      %309 = vmatprep.mubr.bf16.mxu0 0
      %310 = vmatmul.mubr.bf16.gmra.mrb[0].mxu0 %v269
      %v311 = vpop.f32.mrb[0].mxu0
      %v312 = vadd.f32 0.0, %v311
      %v313 = vpop.f32.mrb[0].mxu0
      %v314 = vpop.f32.mrb[0].mxu0
      %v315 = vpop.f32.mrb[0].mxu0
      %316 = vdwg.mxu0
      %v317 = vadd.f32 %v212, %v312
      %vm318 = vcmask 27648
      %319 = vst.msk [vmem:[%s2] sm:$0xf] %vm318, %v317
      // Predicated region
      $region29: #{deconv2d_bn_forward.2} parent=23 // pred_check
        %p320 = pneg %p53
      $region30: #{deconv2d_bn_forward.2} parent=23 // pred_check_branch
        %322 = sbr.rel (%p320) target = $region32
      $region31: #{deconv2d_bn_forward.2} parent=23 // pred_region
        _
      $region32: #{deconv2d_bn_forward.2} parent=23 // pred_fallthru
        _
      // Predicated region
      $region33: #{deconv2d_bn_forward.2} parent=23 // pred_check
        %p323 = pneg %p74
      $region34: #{deconv2d_bn_forward.2} parent=23 // pred_check_branch
        %325 = sbr.rel (%p323) target = $region36
      $region35: #{deconv2d_bn_forward.2} parent=23 // pred_region
        _
      $region36: #{deconv2d_bn_forward.2} parent=23 // pred_fallthru
        _
      // Predicated region
      $region37: #{deconv2d_bn_forward.2} parent=23 // pred_check
        %p326 = pneg %p53
      $region38: #{deconv2d_bn_forward.2} parent=23 // pred_check_branch
        %328 = sbr.rel (%p326) target = $region40
      $region39: #{deconv2d_bn_forward.2} parent=23 // pred_region
        _
      $region40: #{deconv2d_bn_forward.2} parent=23 // pred_fallthru
        _
      // Predicated region
      $region41: #{deconv2d_bn_forward.2} parent=23 // pred_check
        %p329 = pneg %p74
      $region42: #{deconv2d_bn_forward.2} parent=23 // pred_check_branch
        %331 = sbr.rel (%p329) target = $region44
      $region43: #{deconv2d_bn_forward.2} parent=23 // pred_region
        _
      $region44: #{deconv2d_bn_forward.2} parent=23 // pred_fallthru
        _
    $region24: #{deconv2d_bn_forward.2} parent=5 // pred_fallthru
      _
    %p332 = scmp.le.s32.totalorder 2, %s9
    // Predicated region
    $region45: #{deconv2d_bn_forward.2} parent=5 // pred_check
      %p333 = pneg %p332
    $region46: #{deconv2d_bn_forward.2} parent=5 // pred_check_branch
      %335 = sbr.rel (%p333) target = $region48
    $region47: #{deconv2d_bn_forward.2} parent=5 // pred_region
      %s336 = ssub.s32 %s9, 2
    $region48: #{deconv2d_bn_forward.2} parent=5 // pred_fallthru
      _
  $region6: #{deconv2d_bn_forward.2} parent=0 // loop_footer
    %s13 = sadd.s32 1, %s9
  $region7: #{deconv2d_bn_forward.2} parent=0 // loop_footer_branch
    %8 = sbr.rel target = $region3
  $region8: #{deconv2d_bn_forward.2} parent=0 // loop_exit
    _

// kernel: deconv2d_bn_forward.3
$region0: #{deconv2d_bn_forward.3}
  #allocation0 [shape = 'u32[]', space=smem, size = 0x4, offset = 0x4, fixed_abs, tag = 'smem constant byte address 0x4 - core index']
  #allocation1 [shape = 'u32[144,128]{1,0:T(1,128)}', space=vmem, size = 0x12000, scoped, tag = 'internal scratch']
  %s0 = inlined_call_operand.vmem [shape: bf16[512,4], index: 0, kind: input, shape index: {}]
  %s1 = inlined_call_operand.vmem [shape: bf16[4,128], index: 1, kind: input, shape index: {}]
  %s2 = inlined_call_operand.vmem [shape: f32[1,128], index: 2, kind: input, shape index: {}]
  %s3 = inlined_call_operand.vmem [shape: f32[1,128], index: 3, kind: input, shape index: {}]
  %s4 = inlined_call_operand.vmem [shape: f32[512,128], index: 4, kind: output, shape index: {}]
  %s5 = sld [smem:[#allocation0]]
  $region49: #{deconv2d_bn_forward.3} parent=0
    _
  %s7 = ssub.s32 1, %s5
  %s8 = scalar_select 0, %s7, %s5
  loop: start=0, step=1, limit=6
  $region2: #{deconv2d_bn_forward.3} parent=0 // loop_pre_header
    _
  $region3: #{deconv2d_bn_forward.3} parent=0 // loop_header
    %s10 = sphi 0, %s14
    %p11 = scmp.ge.s32.totalorder %s10, 6
    %s20 = sphi 0, %s22
    %s23 = sphi 0, %s20
    %s24 = sphi 0, %s23
    %s40 = sphi 0, %s24
    %s44 = sphi 0, %s44
    %s46 = sphi 0, %s44
    %s47 = sphi 0, %s46
    %s61 = sphi 0, %s47
    %s65 = sphi 0, %s65
    %s67 = sphi 0, %s65
    %s68 = sphi 0, %s67
    %s82 = sphi 0, %s68
    %s86 = sphi 0, %s86
    %s88 = sphi 0, %s86
    %s89 = sphi 0, %s88
    %s103 = sphi 0, %s89
    %s109 = sphi 0, %s111
    %s112 = sphi 0, %s109
    %s113 = sphi 0, %s112
    %s129 = sphi 0, %s113
  $region4: #{deconv2d_bn_forward.3} parent=0 // loop_header_branch
    %13 = sbr.rel (%p11) target = $region8
  $region5: #{deconv2d_bn_forward.3} parent=0 // loop_body
    %s15 = ssub.s32 %s10, 1
    %s16 = ssub.s32 %s10, 2
    %s17 = sadd.s32 %s10, 1
    %s18 = ssub.s32 %s10, %s17
    %p19 = scmp.eq.s32.totalorder %s18, 0
    %s21 = sadd.s32 %s20, 1
    %s22 = scalar_select %p19, %s20, %s21
    %p25 = pneg %p19
    %p26 = scmp.eq.s32.totalorder %s10, 3
    %p27 = por %p25, %p26
    %p28 = scmp.ne.s32.totalorder %s20, %s23
    %p29 = scmp.eq.s32.totalorder %s10, 0
    %p30 = por %p28, %p29
    %p31 = scmp.ne.s32.totalorder %s20, %s23
    %p32 = scmp.eq.s32.totalorder %s15, 3
    %p33 = por %p31, %p32
    %p34 = scmp.ne.s32.totalorder %s23, %s24
    %p35 = scmp.eq.s32.totalorder %s15, 0
    %p36 = por %p34, %p35
    %p37 = scmp.ne.s32.totalorder %s23, %s24
    %p38 = scmp.eq.s32.totalorder %s16, 3
    %p39 = por %p37, %p38
    %p41 = scmp.ne.s32.totalorder %s24, %s40
    %p42 = scmp.eq.s32.totalorder %s16, 0
    %p43 = por %p41, %p42
    %s45 = sadd.s32 %s44, 1
    %p48 = scmp.eq.s32.totalorder %s10, 3
    %p49 = scmp.ne.s32.totalorder %s44, %s46
    %p50 = scmp.eq.s32.totalorder %s10, 0
    %p51 = por %p49, %p50
    %p52 = scmp.ne.s32.totalorder %s44, %s46
    %p53 = scmp.eq.s32.totalorder %s15, 3
    %p54 = por %p52, %p53
    %p55 = scmp.ne.s32.totalorder %s46, %s47
    %p56 = scmp.eq.s32.totalorder %s15, 0
    %p57 = por %p55, %p56
    %p58 = scmp.ne.s32.totalorder %s46, %s47
    %p59 = scmp.eq.s32.totalorder %s16, 3
    %p60 = por %p58, %p59
    %p62 = scmp.ne.s32.totalorder %s47, %s61
    %p63 = scmp.eq.s32.totalorder %s16, 0
    %p64 = por %p62, %p63
    %s66 = sadd.s32 %s65, 1
    %p69 = scmp.eq.s32.totalorder %s10, 3
    %p70 = scmp.ne.s32.totalorder %s65, %s67
    %p71 = scmp.eq.s32.totalorder %s10, 0
    %p72 = por %p70, %p71
    %p73 = scmp.ne.s32.totalorder %s65, %s67
    %p74 = scmp.eq.s32.totalorder %s15, 3
    %p75 = por %p73, %p74
    %p76 = scmp.ne.s32.totalorder %s67, %s68
    %p77 = scmp.eq.s32.totalorder %s15, 0
    %p78 = por %p76, %p77
    %p79 = scmp.ne.s32.totalorder %s67, %s68
    %p80 = scmp.eq.s32.totalorder %s16, 3
    %p81 = por %p79, %p80
    %p83 = scmp.ne.s32.totalorder %s68, %s82
    %p84 = scmp.eq.s32.totalorder %s16, 0
    %p85 = por %p83, %p84
    %s87 = sadd.s32 %s86, 1
    %p90 = scmp.eq.s32.totalorder %s10, 3
    %p91 = scmp.ne.s32.totalorder %s86, %s88
    %p92 = scmp.eq.s32.totalorder %s10, 0
    %p93 = por %p91, %p92
    %p94 = scmp.ne.s32.totalorder %s86, %s88
    %p95 = scmp.eq.s32.totalorder %s15, 3
    %p96 = por %p94, %p95
    %p97 = scmp.ne.s32.totalorder %s88, %s89
    %p98 = scmp.eq.s32.totalorder %s15, 0
    %p99 = por %p97, %p98
    %p100 = scmp.ne.s32.totalorder %s88, %s89
    %p101 = scmp.eq.s32.totalorder %s16, 3
    %p102 = por %p100, %p101
    %p104 = scmp.ne.s32.totalorder %s89, %s103
    %p105 = scmp.eq.s32.totalorder %s16, 0
    %p106 = por %p104, %p105
    %s107 = ssub.s32 %s10, %s17
    %p108 = scmp.eq.s32.totalorder %s107, 0
    %s110 = sadd.s32 %s109, 1
    %s111 = scalar_select %p108, %s109, %s110
    %p114 = pneg %p108
    %p115 = scmp.eq.s32.totalorder %s10, 3
    %p116 = por %p114, %p115
    %p117 = scmp.ne.s32.totalorder %s109, %s112
    %p118 = scmp.eq.s32.totalorder %s10, 0
    %p119 = por %p117, %p118
    %p120 = scmp.ne.s32.totalorder %s109, %s112
    %p121 = scmp.eq.s32.totalorder %s15, 3
    %p122 = por %p120, %p121
    %p123 = scmp.ne.s32.totalorder %s112, %s113
    %p124 = scmp.eq.s32.totalorder %s15, 0
    %p125 = por %p123, %p124
    %p126 = scmp.ne.s32.totalorder %s112, %s113
    %p127 = scmp.eq.s32.totalorder %s16, 3
    %p128 = por %p126, %p127
    %p130 = scmp.ne.s32.totalorder %s113, %s129
    %p131 = scmp.eq.s32.totalorder %s16, 0
    %p132 = por %p130, %p131
    %p133 = scmp.le.s32.totalorder 1, %s10
    %p134 = scmp.lt.s32.totalorder %s10, 5
    %p135 = pnand %p133, %p134
    %p136 = pneg %p135
    // Predicated region
    $region9: #{deconv2d_bn_forward.3} parent=5 // pred_check
      _
    $region10: #{deconv2d_bn_forward.3} parent=5 // pred_check_branch
      %138 = sbr.rel (%p135) target = $region12
    $region11: #{deconv2d_bn_forward.3} parent=5 // pred_region
      %s139 = ssub.s32 %s10, 1
      // Predicated region
      $region13: #{deconv2d_bn_forward.3} parent=11 // pred_check
        %p140 = pneg %p57
      $region14: #{deconv2d_bn_forward.3} parent=11 // pred_check_branch
        %142 = sbr.rel (%p140) target = $region16
      $region15: #{deconv2d_bn_forward.3} parent=11 // pred_region
        _
      $region16: #{deconv2d_bn_forward.3} parent=11 // pred_fallthru
        _
      // Predicated region
      $region17: #{deconv2d_bn_forward.3} parent=11 // pred_check
        %p143 = pneg %p78
      $region18: #{deconv2d_bn_forward.3} parent=11 // pred_check_branch
        %145 = sbr.rel (%p143) target = $region20
      $region19: #{deconv2d_bn_forward.3} parent=11 // pred_region
        _
      $region20: #{deconv2d_bn_forward.3} parent=11 // pred_fallthru
        _
      // Predicated region
      $region21: #{deconv2d_bn_forward.3} parent=11 // pred_check
        %p146 = pneg %p99
      $region22: #{deconv2d_bn_forward.3} parent=11 // pred_check_branch
        %148 = sbr.rel (%p146) target = $region24
      $region23: #{deconv2d_bn_forward.3} parent=11 // pred_region
        _
      $region24: #{deconv2d_bn_forward.3} parent=11 // pred_fallthru
        _
    $region12: #{deconv2d_bn_forward.3} parent=5 // pred_fallthru
      _
    %p149 = scmp.lt.s32.totalorder %s10, 4
    // Predicated region
    $region25: #{deconv2d_bn_forward.3} parent=5 // pred_check
      %p150 = pneg %p149
    $region26: #{deconv2d_bn_forward.3} parent=5 // pred_check_branch
      %152 = sbr.rel (%p150) target = $region28
    $region27: #{deconv2d_bn_forward.3} parent=5 // pred_region
      // Predicated region
      $region29: #{deconv2d_bn_forward.3} parent=27 // pred_check
        %p153 = pneg %p30
      $region30: #{deconv2d_bn_forward.3} parent=27 // pred_check_branch
        %155 = sbr.rel (%p153) target = $region32
      $region31: #{deconv2d_bn_forward.3} parent=27 // pred_region
        %s156 = smul.u32 16, %s10
        %p157 = scmp.lt.s32.totalorder %s156, 63
        %s158 = scalar_select %p157, %s156, 63
        %s159 = smul.addr %s158, 4
        %s160 = scalar_lea.vmem %s0, %s159
        %s161 = smul.u32 16, %s10
      $region32: #{deconv2d_bn_forward.3} parent=27 // pred_fallthru
        _
    $region28: #{deconv2d_bn_forward.3} parent=5 // pred_fallthru
      _
    %p162 = scmp.le.s32.totalorder 1, %s10
    %p163 = scmp.lt.s32.totalorder %s10, 5
    %p164 = pnand %p162, %p163
    %p165 = pneg %p164
    // Predicated region
    $region33: #{deconv2d_bn_forward.3} parent=5 // pred_check
      _
    $region34: #{deconv2d_bn_forward.3} parent=5 // pred_check_branch
      %167 = sbr.rel (%p164) target = $region36
    $region35: #{deconv2d_bn_forward.3} parent=5 // pred_region
      %s168 = ssub.s32 %s10, 1
      %s169 = smul.u32 16, %s15
      %p170 = scmp.lt.s32.totalorder %s169, 63
      %s171 = scalar_select %p170, %s169, 63
      %s172 = smul.addr %s171, 4
      %s173 = scalar_lea.vmem %s0, %s172
      %p174 = pneg %p36
      %p175 = pneg %p33
      %p176 = pneg %p57
      %p177 = pneg %p54
      %p178 = pneg %p78
      %p179 = pneg %p75
      %p180 = pneg %p99
      %p181 = pneg %p96
      %p182 = pneg %p125
      %p183 = pneg %p122
      %s184 = smul.u32 16, %s15
      %p185 = scmp.lt.s32.totalorder %s184, 63
      %s186 = scalar_select %p185, %s184, 63
      %s187 = smul.addr %s186, 8
      %s188 = scalar_lea.vmem %s4, %s187
      %s189 = smul.u32 16, %s15
      %p190 = scmp.lt.s32.totalorder %s189, 63
      %s191 = scalar_select %p190, %s189, 63
      %s192 = smul.addr %s191, 4
      %s193 = scalar_lea.vmem %s0, %s192
      %s194 = smul.u32 16, %s15
      %s195 = smul.u32 16, %s15
      %p196 = scmp.lt.s32.totalorder %s195, 63
      %s197 = scalar_select %p196, %s195, 63
      %s198 = smul.addr %s197, 8
      %s199 = scalar_lea.vmem %s4, %s198
      %s200 = smul.u32 16, %s15
      %v202 = vld [vmem:[%s193] sm:$0xf]
      %v203 = vld [vmem:[%s193 + $0x4] sm:$0xf]
      %v204 = vld [vmem:[%s193 + $0x8] sm:$0xf]
      %v205 = vld [vmem:[%s193 + $0xc] sm:$0xf]
      %v206 = vld [vmem:[%s193 + $0x10] sm:$0xf]
      %v207 = vld [vmem:[%s193 + $0x14] sm:$0xf]
      %v208 = vld [vmem:[%s193 + $0x18] sm:$0xf]
      %v209 = vld [vmem:[%s193 + $0x1c] sm:$0xf]
      %v210 = vld [vmem:[%s193 + $0x20] sm:$0xf]
      %v211 = vld [vmem:[%s193 + $0x24] sm:$0xf]
      %v212 = vld [vmem:[%s193 + $0x28] sm:$0xf]
      %v213 = vld [vmem:[%s193 + $0x2c] sm:$0xf]
      %v214 = vld [vmem:[%s193 + $0x30] sm:$0xf]
      %v215 = vld [vmem:[%s193 + $0x34] sm:$0xf]
      %v216 = vld [vmem:[%s193 + $0x38] sm:$0xf]
      %v217 = vld [vmem:[%s193 + $0x3c] sm:$0xf]
      %v218 = vld [vmem:[%s1] sm:$0x3]
      %v235 = vunpack.c.l.b16 %v202
      %v236 = vunpack.c.l.b16 %v203
      %v237 = vunpack.c.l.b16 %v204
      %v238 = vunpack.c.l.b16 %v205
      %v239 = vunpack.c.l.b16 %v206
      %v240 = vunpack.c.l.b16 %v207
      %v241 = vunpack.c.l.b16 %v208
      %v242 = vunpack.c.l.b16 %v209
      %v243 = vunpack.c.l.b16 %v210
      %v244 = vunpack.c.l.b16 %v211
      %v245 = vunpack.c.l.b16 %v212
      %v246 = vunpack.c.l.b16 %v213
      %v247 = vunpack.c.l.b16 %v214
      %v248 = vunpack.c.l.b16 %v215
      %v249 = vunpack.c.l.b16 %v216
      %v250 = vunpack.c.l.b16 %v217
      %v251 = vpack.c.b16 %v236, %v235
      %v252 = vpack.c.b16 %v238, %v237
      %v253 = vpack.c.b16 %v240, %v239
      %v254 = vpack.c.b16 %v242, %v241
      %v255 = vpack.c.b16 %v244, %v243
      %v256 = vpack.c.b16 %v246, %v245
      %v257 = vpack.c.b16 %v248, %v247
      %v258 = vpack.c.b16 %v250, %v249
      %vm259 = vcmask 31744
      %v261 = vsel %vm259, %v251, 0
      %v264 = vsel %vm259, %v252, 0
      %v267 = vsel %vm259, %v253, 0
      %v270 = vsel %vm259, %v254, 0
      %v273 = vsel %vm259, %v255, 0
      %v276 = vsel %vm259, %v256, 0
      %v279 = vsel %vm259, %v257, 0
      %v282 = vsel %vm259, %v258, 0
      %vm284 = vcmask 1041408
      %v286 = vsel %vm284, %v218, 0
      %288 = vmatprep.subr.bf16.mxu0 0
      %289 = vmatpush1.bf16.msra.mxu0 %v286
      %290 = vmatprep.subr.bf16.mxu0 0
      %291 = vmatpush1.bf16.msra.mxu0 0
      %292 = vmatprep.subr.bf16.mxu0 0
      %293 = vmatpush1.bf16.msra.mxu0 0
      %294 = vmatprep.subr.bf16.mxu0 0
      %295 = vmatpush1.bf16.msra.mxu0 0
      %296 = vmatprep.subr.bf16.mxu0 0
      %297 = vmatpush1.bf16.msra.mxu0 0
      %298 = vmatprep.subr.bf16.mxu0 0
      %299 = vmatpush1.bf16.msra.mxu0 0
      %300 = vmatprep.subr.bf16.mxu0 0
      %301 = vmatpush1.bf16.msra.mxu0 0
      %302 = vmatprep.subr.bf16.mxu0 0
      %303 = vmatpush1.bf16.msra.mxu0 0
      %304 = vmatprep.subr.bf16.mxu0 0
      %305 = vmatpush1.bf16.msra.mxu0 0
      %306 = vmatprep.subr.bf16.mxu0 0
      %307 = vmatpush1.bf16.msra.mxu0 0
      %308 = vmatprep.subr.bf16.mxu0 0
      %309 = vmatpush1.bf16.msra.mxu0 0
      %310 = vmatprep.subr.bf16.mxu0 0
      %311 = vmatpush1.bf16.msra.mxu0 0
      %312 = vmatprep.subr.bf16.mxu0 0
      %313 = vmatpush1.bf16.msra.mxu0 0
      %314 = vmatprep.subr.bf16.mxu0 0
      %315 = vmatpush1.bf16.msra.mxu0 0
      %316 = vmatprep.subr.bf16.mxu0 0
      %317 = vmatpush1.bf16.msra.mxu0 0
      %318 = vmatprep.subr.bf16.mxu0 0
      %319 = vmatpush1.bf16.msra.mxu0 0
      %320 = vmatprep.mubr.bf16.mxu0 0
      %321 = vmatmul.mubr.bf16.gmra.mrb[0].mxu0 %v261
      %v322 = vpop.f32.mrb[0].mxu0
      %v323 = vadd.f32 0.0, %v322
      %v324 = vpop.f32.mrb[0].mxu0
      %v325 = vpop.f32.mrb[0].mxu0
      %v326 = vadd.f32 0.0, %v325
      %v327 = vpop.f32.mrb[0].mxu0
      %328 = vmatprep.mubr.bf16.mxu0 0
      %329 = vmatmul.mubr.bf16.gmra.mrb[0].mxu0 %v264
      %v330 = vpop.f32.mrb[0].mxu0
      %v331 = vadd.f32 0.0, %v330
      %v332 = vpop.f32.mrb[0].mxu0
      %v333 = vpop.f32.mrb[0].mxu0
      %v334 = vadd.f32 0.0, %v333
      %v335 = vpop.f32.mrb[0].mxu0
      %336 = vmatprep.mubr.bf16.mxu0 0
      %337 = vmatmul.mubr.bf16.gmra.mrb[0].mxu0 %v267
      %v338 = vpop.f32.mrb[0].mxu0
      %v339 = vadd.f32 0.0, %v338
      %v340 = vpop.f32.mrb[0].mxu0
      %v341 = vpop.f32.mrb[0].mxu0
      %v342 = vadd.f32 0.0, %v341
      %v343 = vpop.f32.mrb[0].mxu0
      %344 = vmatprep.mubr.bf16.mxu0 0
      %345 = vmatmul.mubr.bf16.gmra.mrb[0].mxu0 %v270
      %v346 = vpop.f32.mrb[0].mxu0
      %v347 = vadd.f32 0.0, %v346
      %v348 = vpop.f32.mrb[0].mxu0
      %v349 = vpop.f32.mrb[0].mxu0
      %v350 = vadd.f32 0.0, %v349
      %v351 = vpop.f32.mrb[0].mxu0
      %352 = vmatprep.mubr.bf16.mxu0 0
      %353 = vmatmul.mubr.bf16.gmra.mrb[0].mxu0 %v273
      %v354 = vpop.f32.mrb[0].mxu0
      %v355 = vadd.f32 0.0, %v354
      %v356 = vpop.f32.mrb[0].mxu0
      %v357 = vpop.f32.mrb[0].mxu0
      %v358 = vadd.f32 0.0, %v357
      %v359 = vpop.f32.mrb[0].mxu0
      %360 = vmatprep.mubr.bf16.mxu0 0
      %361 = vmatmul.mubr.bf16.gmra.mrb[0].mxu0 %v276
      %v362 = vpop.f32.mrb[0].mxu0
      %v363 = vadd.f32 0.0, %v362
      %v364 = vpop.f32.mrb[0].mxu0
      %v365 = vpop.f32.mrb[0].mxu0
      %v366 = vadd.f32 0.0, %v365
      %v367 = vpop.f32.mrb[0].mxu0
      %368 = vmatprep.mubr.bf16.mxu0 0
      %369 = vmatmul.mubr.bf16.gmra.mrb[0].mxu0 %v279
      %v370 = vpop.f32.mrb[0].mxu0
      %v371 = vadd.f32 0.0, %v370
      %v372 = vpop.f32.mrb[0].mxu0
      %v373 = vpop.f32.mrb[0].mxu0
      %v374 = vadd.f32 0.0, %v373
      %v375 = vpop.f32.mrb[0].mxu0
      %376 = vmatprep.mubr.bf16.mxu0 0
      %377 = vmatmul.mubr.bf16.gmra.mrb[0].mxu0 %v282
      %v378 = vpop.f32.mrb[0].mxu0
      %v379 = vadd.f32 0.0, %v378
      %v380 = vpop.f32.mrb[0].mxu0
      %v381 = vpop.f32.mrb[0].mxu0
      %v382 = vadd.f32 0.0, %v381
      %v383 = vpop.f32.mrb[0].mxu0
      %384 = vdwg.mxu0
      %v385 = vld [vmem:[%s2] sm:$0x1]
      %v387 = vlaneseq
      %v388 = vshrl.u32 %v387, 7
      %v389 = vsub.s32 0, %v388
      %v390 = vrot.slane %v385, %v389
      %v392 = vmul.f32 %v323, %v390
      %v393 = vmul.f32 %v326, %v390
      %v394 = vmul.f32 %v331, %v390
      %v395 = vmul.f32 %v334, %v390
      %v396 = vmul.f32 %v339, %v390
      %v397 = vmul.f32 %v342, %v390
      %v398 = vmul.f32 %v347, %v390
      %v399 = vmul.f32 %v350, %v390
      %v400 = vmul.f32 %v355, %v390
      %v401 = vmul.f32 %v358, %v390
      %v402 = vmul.f32 %v363, %v390
      %v403 = vmul.f32 %v366, %v390
      %v404 = vmul.f32 %v371, %v390
      %v405 = vmul.f32 %v374, %v390
      %v406 = vmul.f32 %v379, %v390
      %v407 = vmul.f32 %v382, %v390
      %v408 = vld [vmem:[%s3] sm:$0x1]
      %v410 = vlaneseq
      %v411 = vshrl.u32 %v410, 7
      %v412 = vsub.s32 0, %v411
      %v413 = vrot.slane %v408, %v412
      %v415 = vadd.f32 %v392, %v413
      %v416 = vadd.f32 %v393, %v413
      %v417 = vadd.f32 %v394, %v413
      %v418 = vadd.f32 %v395, %v413
      %v419 = vadd.f32 %v396, %v413
      %v420 = vadd.f32 %v397, %v413
      %v421 = vadd.f32 %v398, %v413
      %v422 = vadd.f32 %v399, %v413
      %v423 = vadd.f32 %v400, %v413
      %v424 = vadd.f32 %v401, %v413
      %v425 = vadd.f32 %v402, %v413
      %v426 = vadd.f32 %v403, %v413
      %v427 = vadd.f32 %v404, %v413
      %v428 = vadd.f32 %v405, %v413
      %v429 = vadd.f32 %v406, %v413
      %v430 = vadd.f32 %v407, %v413
      %v431 = vmax.f32 %v415, 0.0
      %v432 = vmax.f32 %v416, 0.0
      %v433 = vmax.f32 %v417, 0.0
      %v434 = vmax.f32 %v418, 0.0
      %v435 = vmax.f32 %v419, 0.0
      %v436 = vmax.f32 %v420, 0.0
      %v437 = vmax.f32 %v421, 0.0
      %v438 = vmax.f32 %v422, 0.0
      %v439 = vmax.f32 %v423, 0.0
      %v440 = vmax.f32 %v424, 0.0
      %v441 = vmax.f32 %v425, 0.0
      %v442 = vmax.f32 %v426, 0.0
      %v443 = vmax.f32 %v427, 0.0
      %v444 = vmax.f32 %v428, 0.0
      %v445 = vmax.f32 %v429, 0.0
      %v446 = vmax.f32 %v430, 0.0
      %447 = vst [vmem:[%s199] sm:$0xff] %v431
      %448 = vst [vmem:[%s199 + $0x8] sm:$0xff] %v432
      %449 = vst [vmem:[%s199 + $0x10] sm:$0xff] %v433
      %450 = vst [vmem:[%s199 + $0x18] sm:$0xff] %v434
      %451 = vst [vmem:[%s199 + $0x20] sm:$0xff] %v435
      %452 = vst [vmem:[%s199 + $0x28] sm:$0xff] %v436
      %453 = vst [vmem:[%s199 + $0x30] sm:$0xff] %v437
      %454 = vst [vmem:[%s199 + $0x38] sm:$0xff] %v438
      %455 = vst [vmem:[%s199 + $0x40] sm:$0xff] %v439
      %456 = vst [vmem:[%s199 + $0x48] sm:$0xff] %v440
      %457 = vst [vmem:[%s199 + $0x50] sm:$0xff] %v441
      %458 = vst [vmem:[%s199 + $0x58] sm:$0xff] %v442
      %459 = vst [vmem:[%s199 + $0x60] sm:$0xff] %v443
      %460 = vst [vmem:[%s199 + $0x68] sm:$0xff] %v444
      %461 = vst [vmem:[%s199 + $0x70] sm:$0xff] %v445
      %462 = vst [vmem:[%s199 + $0x78] sm:$0xff] %v446
      %s463 = smul.u32 16, %s15
      %p464 = scmp.lt.s32.totalorder %s463, 63
      %s465 = scalar_select %p464, %s463, 63
      %s466 = smul.addr %s465, 8
      %s467 = scalar_lea.vmem %s4, %s466
      // Predicated region
      $region37: #{deconv2d_bn_forward.3} parent=35 // pred_check
        %p468 = pneg %p122
      $region38: #{deconv2d_bn_forward.3} parent=35 // pred_check_branch
        %470 = sbr.rel (%p468) target = $region40
      $region39: #{deconv2d_bn_forward.3} parent=35 // pred_region
        %s471 = smul.u32 16, %s15
      $region40: #{deconv2d_bn_forward.3} parent=35 // pred_fallthru
        _
    $region36: #{deconv2d_bn_forward.3} parent=5 // pred_fallthru
      _
    %p472 = scmp.le.s32.totalorder 2, %s10
    // Predicated region
    $region41: #{deconv2d_bn_forward.3} parent=5 // pred_check
      %p473 = pneg %p472
    $region42: #{deconv2d_bn_forward.3} parent=5 // pred_check_branch
      %475 = sbr.rel (%p473) target = $region44
    $region43: #{deconv2d_bn_forward.3} parent=5 // pred_region
      %s476 = ssub.s32 %s10, 2
      // Predicated region
      $region45: #{deconv2d_bn_forward.3} parent=43 // pred_check
        %p477 = pneg %p128
      $region46: #{deconv2d_bn_forward.3} parent=43 // pred_check_branch
        %479 = sbr.rel (%p477) target = $region48
      $region47: #{deconv2d_bn_forward.3} parent=43 // pred_region
        %s480 = smul.u32 16, %s16
        %p481 = scmp.lt.s32.totalorder %s480, 63
        %s482 = scalar_select %p481, %s480, 63
        %s483 = smul.addr %s482, 8
        %s484 = scalar_lea.vmem %s4, %s483
      $region48: #{deconv2d_bn_forward.3} parent=43 // pred_fallthru
        _
    $region44: #{deconv2d_bn_forward.3} parent=5 // pred_fallthru
      _
  $region6: #{deconv2d_bn_forward.3} parent=0 // loop_footer
    %s14 = sadd.s32 1, %s10
  $region7: #{deconv2d_bn_forward.3} parent=0 // loop_footer_branch
    %9 = sbr.rel target = $region3
  $region8: #{deconv2d_bn_forward.3} parent=0 // loop_exit
    _

</llo_original>
